<compile_context>
chip_gen: v5e
topology: v5e:2x2
jax: 0.10.0
libtpu: 0.0.40
codegen_flags: <defaults>
</compile_context>

<pallas_src>
import jax
import jax.numpy as jnp
from jax import lax
from jax.experimental import pallas as pl
from jax.experimental.pallas import tpu as pltpu


# ---------------------------------------------------------------------------
# Kernels
# ---------------------------------------------------------------------------

def _embed_kernel_packed(idx_ref, tok_ref, time_ref, o_ref):
    """Lane-dense path: K positions packed per 128-lane output row.

    idx_ref:  (block_b, K, TP, 1) int32  ids, idx[b, j, p] = x[b, p*K + j]
    tok_ref:  (K*V, K*D)                 block-diagonal token table (resident)
    time_ref: (TP, K*D)                  packed positional table  (resident)
    o_ref:    (block_b, TP, K*D)
    """
    bb = o_ref.shape[0]
    _, k, tp, _ = idx_ref.shape
    kv = tok_ref.shape[0]
    v = kv // k

    table = tok_ref[...]                                    # load once
    tpos = time_ref[...]                                    # load once
    col = lax.broadcasted_iota(jnp.int32, (tp, kv), 1)      # hoisted

    for bi in range(bb):                                    # static, small
        ids = idx_ref[bi]                                   # (K, TP, 1)
        # K-hot selector: column j*V + ids[j, p] is hot for packed row p.
        hot = jnp.zeros((tp, kv), jnp.float32)
        for j in range(k):                                  # static, K is tiny
            hot = hot + (ids[j] + j * v == col).astype(jnp.float32)
        # One MXU matmul does the gather; exact in f32 (value * 1.0 + zeros).
        tok = jnp.dot(hot, table, preferred_element_type=jnp.float32)
        # Positional term: plain VPU add of the resident packed table.
        o_ref[bi] = (tok + tpos).astype(o_ref.dtype)


def _embed_kernel_simple(idx_ref, tok_ref, time_ref, o_ref):
    """Fallback path (D not packable): per-batch one-hot gather + add.

    idx_ref:  (block_b, T, 1) int32
    tok_ref:  (V, D)   token table (resident)
    time_ref: (T, D)   transposed positional table (resident)
    o_ref:    (block_b, T, D)
    """
    bb = o_ref.shape[0]
    t = idx_ref.shape[1]
    v = tok_ref.shape[0]

    table = tok_ref[...]
    tpos = time_ref[...]
    col = lax.broadcasted_iota(jnp.int32, (t, v), 1)

    for bi in range(bb):                                    # static, small
        hot = (idx_ref[bi] == col).astype(jnp.float32)      # (T, V)
        tok = jnp.dot(hot, table, preferred_element_type=jnp.float32)
        o_ref[bi] = (tok + tpos).astype(o_ref.dtype)


# ---------------------------------------------------------------------------
# Wrapper
# ---------------------------------------------------------------------------

def _pick_block_b(b, rows_per_batch, target_rows=512):
    """Largest divisor of b with block_b * rows_per_batch <= ~target_rows,
    keeping >= 2 grid steps when b >= 2 (v7x has 2 TensorCores)."""
    best = 1
    for c in range(1, b + 1):
        if b % c:
            continue
        if c * rows_per_batch > max(target_rows, rows_per_batch):
            continue
        if b // c >= 2 or b == 1:
            best = c
    return best


@jax.jit
def embedding_forward(x, token_weight, time_weight):
    """x: (B, T) int token ids; token_weight: (V, D); time_weight: (D, >=T).

    Returns (B, T, D) = token_weight[x] + time_weight[:, :T].T
    """
    b, t = x.shape
    v, d = token_weight.shape
    time_td = jnp.transpose(time_weight[:, :t])          # (T, D): one tiny transpose

    params = pltpu.CompilerParams(dimension_semantics=("parallel",))

    k = 128 // d if (d < 128 and 128 % d == 0) else 1
    if k > 1 and t % k == 0:
        # ------------------- lane-dense packed path -------------------------
        tp = t // k
        block_b = _pick_block_b(b, tp)

        # Block-diagonal (K*V, K*D) token table: column block j holds the
        # embedding for the j-th packed position of each 128-lane output row.
        tok_bd = jnp.kron(jnp.eye(k, dtype=token_weight.dtype), token_weight)
        time_packed = time_td.reshape(tp, k * d)          # contiguous view

        # ids[b, j, p] = x[b, p*K + j]
        idx = jnp.transpose(x.astype(jnp.int32).reshape(b, tp, k),
                            (0, 2, 1))[..., None]         # (B, K, TP, 1)

        out = pl.pallas_call(
            _embed_kernel_packed,
            out_shape=jax.ShapeDtypeStruct((b, tp, k * d), token_weight.dtype),
            grid_spec=pltpu.PrefetchScalarGridSpec(
                num_scalar_prefetch=0,
                grid=(b // block_b,),
                in_specs=[
                    pl.BlockSpec((block_b, k, tp, 1), lambda i: (i, 0, 0, 0)),
                    pl.BlockSpec((k * v, k * d), lambda i: (0, 0),
                                 pipeline_mode=pl.Buffered(1)),   # resident
                    pl.BlockSpec((tp, k * d), lambda i: (0, 0),
                                 pipeline_mode=pl.Buffered(1)),   # resident
                ],
                out_specs=pl.BlockSpec((block_b, tp, k * d),
                                       lambda i: (i, 0, 0)),
            ),
            compiler_params=params,
        )(idx, tok_bd, time_packed)
        return out.reshape(b, t, d)                       # free contiguous view

    # ----------------------- general fallback path --------------------------
    block_b = _pick_block_b(b, t)
    idx = x.astype(jnp.int32)[..., None]                  # (B, T, 1)
    out = pl.pallas_call(
        _embed_kernel_simple,
        out_shape=jax.ShapeDtypeStruct((b, t, d), token_weight.dtype),
        grid_spec=pltpu.PrefetchScalarGridSpec(
            num_scalar_prefetch=0,
            grid=(b // block_b,),
            in_specs=[
                pl.BlockSpec((block_b, t, 1), lambda i: (i, 0, 0)),
                pl.BlockSpec((v, d), lambda i: (0, 0),
                             pipeline_mode=pl.Buffered(1)),       # resident
                pl.BlockSpec((t, d), lambda i: (0, 0),
                             pipeline_mode=pl.Buffered(1)),       # resident
            ],
            out_specs=pl.BlockSpec((block_b, t, d), lambda i: (i, 0, 0)),
        ),
        compiler_params=params,
    )(idx, token_weight, time_td)
    return out


def _reference(x, token_weight, time_weight):
    """Pure-JAX reference matching the PyTorch forward semantics."""
    b, t = x.shape
    tok = token_weight[x]                                 # (B, T, D)
    tim = jnp.transpose(time_weight[:, :t])[None, :, :]   # (1, T, D)
    return tok + tim


if __name__ == "__main__":
    # Module defaults: embedding_dim=64, n_vocal=128, context_len=50; batch=2.
    B, T, D, V = 2, 50, 64, 128

    key = jax.random.PRNGKey(0)
    kx, kt, kp = jax.random.split(key, 3)
    x = jax.random.randint(kx, (B, T), 0, V, dtype=jnp.int32)
    token_weight = jax.random.normal(kt, (V, D), dtype=jnp.float32)  # nn.Embedding weight
    time_weight = jax.random.normal(kp, (D, T), dtype=jnp.float32)   # nn.Parameter randn(D, T)

    out = embedding_forward(x, token_weight, time_weight)
    jax.block_until_ready(out)

    ref = _reference(x, token_weight, time_weight)
    assert out.shape == (B, T, D)
    assert jnp.allclose(out, ref, atol=1e-5, rtol=1e-5), "mismatch vs reference"

    print("KERNEL_OK")
</pallas_src>

<mosaic_0001>
module attributes {stable_mosaic.version = 11 : i64} {
  func.func @_embed_kernel_packed(%arg0: i32, %arg1: memref<1x2x25x1xi32, #tpu.memory_space<vmem>>, %arg2: memref<256x128xf32, #tpu.memory_space<vmem>>, %arg3: memref<25x128xf32, #tpu.memory_space<vmem>>, %arg4: memref<1x25x128xf32, #tpu.memory_space<vmem>>) attributes {dimension_semantics = [#tpu.dimension_semantics<parallel>], iteration_bounds = array<i64: 2>, scalar_prefetch = 0 : i64, scratch_operands = 0 : i64, tpu.core_type = #tpu.core_type<tc>, window_params = [{transform_indices = @transform_0, window_bounds = array<i64: 1, 2, 25, 1>}, {pipeline_mode = #tpu.pipeline_mode<synchronous>, transform_indices = @transform_1, window_bounds = array<i64: 256, 128>}, {pipeline_mode = #tpu.pipeline_mode<synchronous>, transform_indices = @transform_2, window_bounds = array<i64: 25, 128>}, {transform_indices = @transform_3, window_bounds = array<i64: 1, 25, 128>}]} {
    %c0 = arith.constant 0 : index
    %c0_0 = arith.constant 0 : index
    %0 = vector.load %arg2[%c0, %c0_0] : memref<256x128xf32, #tpu.memory_space<vmem>>, vector<256x128xf32>
    %c0_1 = arith.constant 0 : index
    %c0_2 = arith.constant 0 : index
    %1 = vector.load %arg3[%c0_1, %c0_2] : memref<25x128xf32, #tpu.memory_space<vmem>>, vector<25x128xf32>
    %2 = tpu.iota {dimensions = array<i32: 1>} : vector<25x256xi32>
    %c0_3 = arith.constant 0 : index
    %c0_4 = arith.constant 0 : index
    %c0_5 = arith.constant 0 : index
    %c0_6 = arith.constant 0 : index
    %3 = vector.load %arg1[%c0_3, %c0_4, %c0_5, %c0_6] : memref<1x2x25x1xi32, #tpu.memory_space<vmem>>, vector<1x2x25x1xi32>
    %4 = vector.shape_cast %3 : vector<1x2x25x1xi32> to vector<2x25x1xi32>
    %cst = arith.constant 0.000000e+00 : f32
    %5 = vector.broadcast %cst : f32 to vector<25x256xf32>
    %6 = vector.extract_strided_slice %4 {offsets = [0, 0, 0], sizes = [1, 25, 1], strides = [1, 1, 1]} : vector<2x25x1xi32> to vector<1x25x1xi32>
    %7 = vector.shape_cast %6 : vector<1x25x1xi32> to vector<25x1xi32>
    %c0_i32 = arith.constant 0 : i32
    %8 = vector.broadcast %c0_i32 : i32 to vector<25x1xi32>
    %9 = arith.addi %7, %8 : vector<25x1xi32>
    %10 = vector.broadcast %9 : vector<25x1xi32> to vector<25x256xi32>
    %11 = arith.cmpi eq, %10, %2 : vector<25x256xi32>
    %12 = arith.extui %11 : vector<25x256xi1> to vector<25x256xi32>
    %13 = arith.sitofp %12 : vector<25x256xi32> to vector<25x256xf32>
    %14 = arith.addf %5, %13 : vector<25x256xf32>
    %15 = vector.extract_strided_slice %4 {offsets = [1, 0, 0], sizes = [1, 25, 1], strides = [1, 1, 1]} : vector<2x25x1xi32> to vector<1x25x1xi32>
    %16 = vector.shape_cast %15 : vector<1x25x1xi32> to vector<25x1xi32>
    %c128_i32 = arith.constant 128 : i32
    %17 = vector.broadcast %c128_i32 : i32 to vector<25x1xi32>
    %18 = arith.addi %16, %17 : vector<25x1xi32>
    %19 = vector.broadcast %18 : vector<25x1xi32> to vector<25x256xi32>
    %20 = arith.cmpi eq, %19, %2 : vector<25x256xi32>
    %21 = arith.extui %20 : vector<25x256xi1> to vector<25x256xi32>
    %22 = arith.sitofp %21 : vector<25x256xi32> to vector<25x256xf32>
    %23 = arith.addf %14, %22 : vector<25x256xf32>
    %cst_7 = arith.constant dense<0.000000e+00> : vector<25x128xf32>
    %24 = tpu.matmul %23, %0, %cst_7 {dimension_numbers = #tpu.dot_dimension_numbers<[1], [0], [0], [1], [0, 0, 1, 1], [], []>} : vector<25x256xf32>, vector<256x128xf32>, vector<25x128xf32> -> vector<25x128xf32>
    %25 = arith.addf %24, %1 : vector<25x128xf32>
    %c0_8 = arith.constant 0 : index
    %c0_9 = arith.constant 0 : index
    %c0_10 = arith.constant 0 : index
    %26 = vector.load %arg4[%c0_8, %c0_9, %c0_10] : memref<1x25x128xf32, #tpu.memory_space<vmem>>, vector<1x25x128xf32>
    %27 = vector.shape_cast %26 : vector<1x25x128xf32> to vector<25x128xf32>
    %28 = vector.shape_cast %25 : vector<25x128xf32> to vector<1x25x128xf32>
    tpu.vector_store %arg4[%c0_8, %c0_9, %c0_10], %28 {strides = array<i32>} : memref<1x25x128xf32, #tpu.memory_space<vmem>>, vector<1x25x128xf32>,
    return
  }
  func.func @transform_0(%arg0: i32) -> (i32, i32, i32, i32) {
    %c0_i32 = arith.constant 0 : i32
    %c0_i32_0 = arith.constant 0 : i32
    %c0_i32_1 = arith.constant 0 : i32
    %c0_i32_2 = arith.constant 0 : i32
    return %arg0, %c0_i32, %c0_i32_0, %c0_i32_1 : i32, i32, i32, i32
  }
  func.func @transform_1(%arg0: i32) -> (i32, i32) {
    %c0_i32 = arith.constant 0 : i32
    %c0_i32_0 = arith.constant 0 : i32
    %c0_i32_1 = arith.constant 0 : i32
    return %c0_i32, %c0_i32_0 : i32, i32
  }
  func.func @transform_2(%arg0: i32) -> (i32, i32) {
    %c0_i32 = arith.constant 0 : i32
    %c0_i32_0 = arith.constant 0 : i32
    %c0_i32_1 = arith.constant 0 : i32
    return %c0_i32, %c0_i32_0 : i32, i32
  }
  func.func @transform_3(%arg0: i32) -> (i32, i32, i32) {
    %c0_i32 = arith.constant 0 : i32
    %c0_i32_0 = arith.constant 0 : i32
    %c0_i32_1 = arith.constant 0 : i32
    return %arg0, %c0_i32, %c0_i32_0 : i32, i32, i32
  }
}

</mosaic_0001>

<llo_original>
// kernel: embedding_forward.1
$region0: #{embedding_forward.1}
  #allocation0 [shape = 'u32[]', space=smem, size = 0x4, offset = 0x4, fixed_abs, tag = 'smem constant byte address 0x4 - core index']
  #allocation1 [shape = 'u32[72,128]{1,0:T(1,128)}', space=vmem, size = 0x9000, scoped, tag = 'internal scratch']
  %s0 = inlined_call_operand.vmem [shape: s32[2,2,25,1], index: 0, kind: input, shape index: {}]
  %s1 = inlined_call_operand.vmem [shape: f32[256,128], index: 1, kind: input, shape index: {}]
  %s2 = inlined_call_operand.vmem [shape: f32[25,128], index: 2, kind: input, shape index: {}]
  %s3 = inlined_call_operand.vmem [shape: f32[2,25,128], index: 3, kind: output, shape index: {}]
  %s4 = sld [smem:[#allocation0]]
  $region45: #{embedding_forward.1} parent=0
    _
  %s6 = ssub.s32 1, %s4
  %s7 = scalar_select 0, %s6, %s4
  loop: start=0, step=1, limit=4
  $region2: #{embedding_forward.1} parent=0 // loop_pre_header
    _
  $region3: #{embedding_forward.1} parent=0 // loop_header
    %s9 = sphi 0, %s13
    %p10 = scmp.ge.s32.totalorder %s9, 4
    %s19 = sphi 0, %s21
    %s22 = sphi 0, %s19
    %s23 = sphi 0, %s22
    %s39 = sphi 0, %s23
    %s43 = sphi 0, %s43
    %s45 = sphi 0, %s43
    %s46 = sphi 0, %s45
    %s60 = sphi 0, %s46
    %s64 = sphi 0, %s64
    %s66 = sphi 0, %s64
    %s67 = sphi 0, %s66
    %s81 = sphi 0, %s67
    %s87 = sphi 0, %s89
    %s90 = sphi 0, %s87
    %s91 = sphi 0, %s90
    %s107 = sphi 0, %s91
  $region4: #{embedding_forward.1} parent=0 // loop_header_branch
    %12 = sbr.rel (%p10) target = $region8
  $region5: #{embedding_forward.1} parent=0 // loop_body
    %s14 = ssub.s32 %s9, 1
    %s15 = ssub.s32 %s9, 2
    %s16 = sadd.s32 %s9, 1
    %s17 = ssub.s32 %s9, %s16
    %p18 = scmp.eq.s32.totalorder %s17, 0
    %s20 = sadd.s32 %s19, 1
    %s21 = scalar_select %p18, %s19, %s20
    %p24 = pneg %p18
    %p25 = scmp.eq.s32.totalorder %s9, 1
    %p26 = por %p24, %p25
    %p27 = scmp.ne.s32.totalorder %s19, %s22
    %p28 = scmp.eq.s32.totalorder %s9, 0
    %p29 = por %p27, %p28
    %p30 = scmp.ne.s32.totalorder %s19, %s22
    %p31 = scmp.eq.s32.totalorder %s14, 1
    %p32 = por %p30, %p31
    %p33 = scmp.ne.s32.totalorder %s22, %s23
    %p34 = scmp.eq.s32.totalorder %s14, 0
    %p35 = por %p33, %p34
    %p36 = scmp.ne.s32.totalorder %s22, %s23
    %p37 = scmp.eq.s32.totalorder %s15, 1
    %p38 = por %p36, %p37
    %p40 = scmp.ne.s32.totalorder %s23, %s39
    %p41 = scmp.eq.s32.totalorder %s15, 0
    %p42 = por %p40, %p41
    %s44 = sadd.s32 %s43, 1
    %p47 = scmp.eq.s32.totalorder %s9, 1
    %p48 = scmp.ne.s32.totalorder %s43, %s45
    %p49 = scmp.eq.s32.totalorder %s9, 0
    %p50 = por %p48, %p49
    %p51 = scmp.ne.s32.totalorder %s43, %s45
    %p52 = scmp.eq.s32.totalorder %s14, 1
    %p53 = por %p51, %p52
    %p54 = scmp.ne.s32.totalorder %s45, %s46
    %p55 = scmp.eq.s32.totalorder %s14, 0
    %p56 = por %p54, %p55
    %p57 = scmp.ne.s32.totalorder %s45, %s46
    %p58 = scmp.eq.s32.totalorder %s15, 1
    %p59 = por %p57, %p58
    %p61 = scmp.ne.s32.totalorder %s46, %s60
    %p62 = scmp.eq.s32.totalorder %s15, 0
    %p63 = por %p61, %p62
    %s65 = sadd.s32 %s64, 1
    %p68 = scmp.eq.s32.totalorder %s9, 1
    %p69 = scmp.ne.s32.totalorder %s64, %s66
    %p70 = scmp.eq.s32.totalorder %s9, 0
    %p71 = por %p69, %p70
    %p72 = scmp.ne.s32.totalorder %s64, %s66
    %p73 = scmp.eq.s32.totalorder %s14, 1
    %p74 = por %p72, %p73
    %p75 = scmp.ne.s32.totalorder %s66, %s67
    %p76 = scmp.eq.s32.totalorder %s14, 0
    %p77 = por %p75, %p76
    %p78 = scmp.ne.s32.totalorder %s66, %s67
    %p79 = scmp.eq.s32.totalorder %s15, 1
    %p80 = por %p78, %p79
    %p82 = scmp.ne.s32.totalorder %s67, %s81
    %p83 = scmp.eq.s32.totalorder %s15, 0
    %p84 = por %p82, %p83
    %s85 = ssub.s32 %s9, %s16
    %p86 = scmp.eq.s32.totalorder %s85, 0
    %s88 = sadd.s32 %s87, 1
    %s89 = scalar_select %p86, %s87, %s88
    %p92 = pneg %p86
    %p93 = scmp.eq.s32.totalorder %s9, 1
    %p94 = por %p92, %p93
    %p95 = scmp.ne.s32.totalorder %s87, %s90
    %p96 = scmp.eq.s32.totalorder %s9, 0
    %p97 = por %p95, %p96
    %p98 = scmp.ne.s32.totalorder %s87, %s90
    %p99 = scmp.eq.s32.totalorder %s14, 1
    %p100 = por %p98, %p99
    %p101 = scmp.ne.s32.totalorder %s90, %s91
    %p102 = scmp.eq.s32.totalorder %s14, 0
    %p103 = por %p101, %p102
    %p104 = scmp.ne.s32.totalorder %s90, %s91
    %p105 = scmp.eq.s32.totalorder %s15, 1
    %p106 = por %p104, %p105
    %p108 = scmp.ne.s32.totalorder %s91, %s107
    %p109 = scmp.eq.s32.totalorder %s15, 0
    %p110 = por %p108, %p109
    %p111 = scmp.le.s32.totalorder 1, %s9
    %p112 = scmp.lt.s32.totalorder %s9, 3
    %p113 = pnand %p111, %p112
    %p114 = pneg %p113
    // Predicated region
    $region9: #{embedding_forward.1} parent=5 // pred_check
      _
    $region10: #{embedding_forward.1} parent=5 // pred_check_branch
      %116 = sbr.rel (%p113) target = $region12
    $region11: #{embedding_forward.1} parent=5 // pred_region
      %s117 = ssub.s32 %s9, 1
      // Predicated region
      $region13: #{embedding_forward.1} parent=11 // pred_check
        %p118 = pneg %p56
      $region14: #{embedding_forward.1} parent=11 // pred_check_branch
        %120 = sbr.rel (%p118) target = $region16
      $region15: #{embedding_forward.1} parent=11 // pred_region
        _
      $region16: #{embedding_forward.1} parent=11 // pred_fallthru
        _
      // Predicated region
      $region17: #{embedding_forward.1} parent=11 // pred_check
        %p121 = pneg %p77
      $region18: #{embedding_forward.1} parent=11 // pred_check_branch
        %123 = sbr.rel (%p121) target = $region20
      $region19: #{embedding_forward.1} parent=11 // pred_region
        _
      $region20: #{embedding_forward.1} parent=11 // pred_fallthru
        _
    $region12: #{embedding_forward.1} parent=5 // pred_fallthru
      _
    %p124 = scmp.lt.s32.totalorder %s9, 2
    // Predicated region
    $region21: #{embedding_forward.1} parent=5 // pred_check
      %p125 = pneg %p124
    $region22: #{embedding_forward.1} parent=5 // pred_check_branch
      %127 = sbr.rel (%p125) target = $region24
    $region23: #{embedding_forward.1} parent=5 // pred_region
      // Predicated region
      $region25: #{embedding_forward.1} parent=23 // pred_check
        %p128 = pneg %p29
      $region26: #{embedding_forward.1} parent=23 // pred_check_branch
        %130 = sbr.rel (%p128) target = $region28
      $region27: #{embedding_forward.1} parent=23 // pred_region
        %p131 = scmp.lt.s32.totalorder %s9, 1
        %s132 = scalar_select %p131, %s9, 1
        %s133 = smul.addr %s132, 8
        %s134 = smul.addr %s133, 8
        %s135 = scalar_lea.vmem %s0, %s134
      $region28: #{embedding_forward.1} parent=23 // pred_fallthru
        _
    $region24: #{embedding_forward.1} parent=5 // pred_fallthru
      _
    %p136 = scmp.le.s32.totalorder 1, %s9
    %p137 = scmp.lt.s32.totalorder %s9, 3
    %p138 = pnand %p136, %p137
    %p139 = pneg %p138
    // Predicated region
    $region29: #{embedding_forward.1} parent=5 // pred_check
      _
    $region30: #{embedding_forward.1} parent=5 // pred_check_branch
      %141 = sbr.rel (%p138) target = $region32
    $region31: #{embedding_forward.1} parent=5 // pred_region
      %s142 = ssub.s32 %s9, 1
      %p143 = scmp.lt.s32.totalorder %s14, 1
      %s144 = scalar_select %p143, %s14, 1
      %s145 = smul.addr %s144, 8
      %s146 = smul.addr %s145, 8
      %s147 = scalar_lea.vmem %s0, %s146
      %p148 = pneg %p35
      %p149 = pneg %p32
      %p150 = pneg %p56
      %p151 = pneg %p53
      %p152 = pneg %p77
      %p153 = pneg %p74
      %p154 = pneg %p103
      %p155 = pneg %p100
      %p156 = scmp.lt.s32.totalorder %s14, 1
      %s157 = scalar_select %p156, %s14, 1
      %s158 = smul.addr %s157, 4
      %s159 = smul.addr %s158, 8
      %s160 = scalar_lea.vmem %s3, %s159
      %p161 = scmp.lt.s32.totalorder %s14, 1
      %s162 = scalar_select %p161, %s14, 1
      %s163 = smul.addr %s162, 8
      %s164 = smul.addr %s163, 8
      %s165 = scalar_lea.vmem %s0, %s164
      %p166 = scmp.lt.s32.totalorder %s14, 1
      %s167 = scalar_select %p166, %s14, 1
      %s168 = smul.addr %s167, 4
      %s169 = smul.addr %s168, 8
      %s170 = scalar_lea.vmem %s3, %s169
      %v171 = vld [vmem:[%s1] sm:$0xff]
      %v172 = vld [vmem:[%s1 + $0x8] sm:$0xff]
      %v173 = vld [vmem:[%s1 + $0x10] sm:$0xff]
      %v174 = vld [vmem:[%s1 + $0x18] sm:$0xff]
      %v175 = vld [vmem:[%s1 + $0x20] sm:$0xff]
      %v176 = vld [vmem:[%s1 + $0x28] sm:$0xff]
      %v177 = vld [vmem:[%s1 + $0x30] sm:$0xff]
      %v178 = vld [vmem:[%s1 + $0x38] sm:$0xff]
      %v179 = vld [vmem:[%s1 + $0x40] sm:$0xff]
      %v180 = vld [vmem:[%s1 + $0x48] sm:$0xff]
      %v181 = vld [vmem:[%s1 + $0x50] sm:$0xff]
      %v182 = vld [vmem:[%s1 + $0x58] sm:$0xff]
      %v183 = vld [vmem:[%s1 + $0x60] sm:$0xff]
      %v184 = vld [vmem:[%s1 + $0x68] sm:$0xff]
      %v185 = vld [vmem:[%s1 + $0x70] sm:$0xff]
      %v186 = vld [vmem:[%s1 + $0x78] sm:$0xff]
      %v187 = vld [vmem:[%s1 + $0x80] sm:$0xff]
      %v188 = vld [vmem:[%s1 + $0x88] sm:$0xff]
      %v189 = vld [vmem:[%s1 + $0x90] sm:$0xff]
      %v190 = vld [vmem:[%s1 + $0x98] sm:$0xff]
      %v191 = vld [vmem:[%s1 + $0xa0] sm:$0xff]
      %v192 = vld [vmem:[%s1 + $0xa8] sm:$0xff]
      %v193 = vld [vmem:[%s1 + $0xb0] sm:$0xff]
      %v194 = vld [vmem:[%s1 + $0xb8] sm:$0xff]
      %v195 = vld [vmem:[%s1 + $0xc0] sm:$0xff]
      %v196 = vld [vmem:[%s1 + $0xc8] sm:$0xff]
      %v197 = vld [vmem:[%s1 + $0xd0] sm:$0xff]
      %v198 = vld [vmem:[%s1 + $0xd8] sm:$0xff]
      %v199 = vld [vmem:[%s1 + $0xe0] sm:$0xff]
      %v200 = vld [vmem:[%s1 + $0xe8] sm:$0xff]
      %v201 = vld [vmem:[%s1 + $0xf0] sm:$0xff]
      %v202 = vld [vmem:[%s1 + $0xf8] sm:$0xff]
      %v203 = vld [vmem:[%s2] sm:$0xff]
      %v204 = vld [vmem:[%s2 + $0x8] sm:$0xff]
      %v205 = vld [vmem:[%s2 + $0x10] sm:$0xff]
      %v206 = vld [vmem:[%s2 + $0x18] sm:$0x1]
      %v207 = vlaneseq
      %v208 = vand.u32 %v207, 127
      %v209 = vadd.s32 %v208, 128
      %v210 = vld [vmem:[%s165] sm:$0xff]
      %v211 = vld [vmem:[%s165 + $0x8] sm:$0xff]
      %v212 = vld [vmem:[%s165 + $0x10] sm:$0xff]
      %v213 = vld [vmem:[%s165 + $0x18] sm:$0x1]
      %v214 = vld [vmem:[%s165 + $0x20] sm:$0xff]
      %v215 = vld [vmem:[%s165 + $0x28] sm:$0xff]
      %v216 = vld [vmem:[%s165 + $0x30] sm:$0xff]
      %v217 = vld [vmem:[%s165 + $0x38] sm:$0x1]
      %218 = vset.pattern.permute.xlu0 0
      %219 = vperm.xlu0 %218, %v210
      %v220 = vpop.permute.xlu0 %219
      %221 = vset.pattern.permute.xlu0 0
      %222 = vperm.xlu0 %221, %v211
      %v223 = vpop.permute.xlu0 %222
      %224 = vset.pattern.permute.xlu0 0
      %225 = vperm.xlu0 %224, %v212
      %v226 = vpop.permute.xlu0 %225
      %227 = vset.pattern.permute.xlu0 0
      %228 = vperm.xlu0 %227, %v213
      %v229 = vpop.permute.xlu0 %228
      %vm230 = vcmp.eq.s32.totalorder %v220, %v208
      %vm231 = vcmp.eq.s32.totalorder %v220, %v209
      %vm232 = vcmp.eq.s32.totalorder %v223, %v208
      %vm233 = vcmp.eq.s32.totalorder %v223, %v209
      %vm234 = vcmp.eq.s32.totalorder %v226, %v208
      %vm235 = vcmp.eq.s32.totalorder %v226, %v209
      %vm236 = vcmp.eq.s32.totalorder %v229, %v208
      %vm237 = vcmp.eq.s32.totalorder %v229, %v209
      %v238 = vsel %vm230, 1, 0
      %v239 = vsel %vm231, 1, 0
      %v240 = vsel %vm232, 1, 0
      %v241 = vsel %vm233, 1, 0
      %v242 = vsel %vm234, 1, 0
      %v243 = vsel %vm235, 1, 0
      %v244 = vsel %vm236, 1, 0
      %v245 = vsel %vm237, 1, 0
      %v246 = vcvt.s32.f32 %v238
      %v247 = vcvt.s32.f32 %v239
      %v248 = vcvt.s32.f32 %v240
      %v249 = vcvt.s32.f32 %v241
      %v250 = vcvt.s32.f32 %v242
      %v251 = vcvt.s32.f32 %v243
      %v252 = vcvt.s32.f32 %v244
      %v253 = vcvt.s32.f32 %v245
      %v254 = vadd.f32 %v246, 0.0
      %v255 = vadd.f32 %v247, 0.0
      %v256 = vadd.f32 %v248, 0.0
      %v257 = vadd.f32 %v249, 0.0
      %v258 = vadd.f32 %v250, 0.0
      %v259 = vadd.f32 %v251, 0.0
      %v260 = vadd.f32 %v252, 0.0
      %v261 = vadd.f32 %v253, 0.0
      %v262 = vadd.s32 %v214, 128
      %v263 = vadd.s32 %v215, 128
      %v264 = vadd.s32 %v216, 128
      %v265 = vadd.s32 %v217, 128
      %266 = vset.pattern.permute.xlu0 0
      %267 = vperm.xlu0 %266, %v262
      %v268 = vpop.permute.xlu0 %267
      %269 = vset.pattern.permute.xlu0 0
      %270 = vperm.xlu0 %269, %v263
      %v271 = vpop.permute.xlu0 %270
      %272 = vset.pattern.permute.xlu0 0
      %273 = vperm.xlu0 %272, %v264
      %v274 = vpop.permute.xlu0 %273
      %275 = vset.pattern.permute.xlu0 0
      %276 = vperm.xlu0 %275, %v265
      %v277 = vpop.permute.xlu0 %276
      %vm278 = vcmp.eq.s32.totalorder %v268, %v208
      %vm279 = vcmp.eq.s32.totalorder %v268, %v209
      %vm280 = vcmp.eq.s32.totalorder %v271, %v208
      %vm281 = vcmp.eq.s32.totalorder %v271, %v209
      %vm282 = vcmp.eq.s32.totalorder %v274, %v208
      %vm283 = vcmp.eq.s32.totalorder %v274, %v209
      %vm284 = vcmp.eq.s32.totalorder %v277, %v208
      %vm285 = vcmp.eq.s32.totalorder %v277, %v209
      %v286 = vsel %vm278, 1, 0
      %v287 = vsel %vm279, 1, 0
      %v288 = vsel %vm280, 1, 0
      %v289 = vsel %vm281, 1, 0
      %v290 = vsel %vm282, 1, 0
      %v291 = vsel %vm283, 1, 0
      %v292 = vsel %vm284, 1, 0
      %v293 = vsel %vm285, 1, 0
      %v294 = vcvt.s32.f32 %v286
      %v295 = vcvt.s32.f32 %v287
      %v296 = vcvt.s32.f32 %v288
      %v297 = vcvt.s32.f32 %v289
      %v298 = vcvt.s32.f32 %v290
      %v299 = vcvt.s32.f32 %v291
      %v300 = vcvt.s32.f32 %v292
      %v301 = vcvt.s32.f32 %v293
      %v302 = vadd.f32 %v254, %v294
      %v303 = vadd.f32 %v255, %v295
      %v304 = vadd.f32 %v256, %v296
      %v305 = vadd.f32 %v257, %v297
      %v306 = vadd.f32 %v258, %v298
      %v307 = vadd.f32 %v259, %v299
      %v308 = vadd.f32 %v260, %v300
      %v309 = vadd.f32 %v261, %v301
      %310 = vmatpush.msra.mxu0 %v186
      %311 = vmatpush.msra.mxu0 %v185
      %312 = vmatpush.msra.mxu0 %v184
      %313 = vmatpush.msra.mxu0 %v183
      %314 = vmatpush.msra.mxu0 %v182
      %315 = vmatpush.msra.mxu0 %v181
      %316 = vmatpush.msra.mxu0 %v180
      %317 = vmatpush.msra.mxu0 %v179
      %318 = vmatpush.msra.mxu0 %v178
      %319 = vmatpush.msra.mxu0 %v177
      %320 = vmatpush.msra.mxu0 %v176
      %321 = vmatpush.msra.mxu0 %v175
      %322 = vmatpush.msra.mxu0 %v174
      %323 = vmatpush.msra.mxu0 %v173
      %324 = vmatpush.msra.mxu0 %v172
      %325 = vmatpush.msra.mxu0 %v171
      %326 = vmatmul.f32.gmra.mxu0 %v302
      %v327 = vpop.f32.mrf.mxu0
      %v328 = vadd.f32 %v203, %v327
      %329 = vmatmul.f32.gmra.mxu0 %v304
      %v330 = vpop.f32.mrf.mxu0
      %v331 = vadd.f32 %v204, %v330
      %332 = vmatmul.f32.gmra.mxu0 %v306
      %v333 = vpop.f32.mrf.mxu0
      %v334 = vadd.f32 %v205, %v333
      %335 = vmatmul.f32.gmra.mxu0 %v308
      %v336 = vpop.f32.mrf.mxu0
      %v337 = vadd.f32 %v206, %v336
      %338 = vdwg.mxu0
      %339 = vmatpush.msra.mxu0 %v202
      %340 = vmatpush.msra.mxu0 %v201
      %341 = vmatpush.msra.mxu0 %v200
      %342 = vmatpush.msra.mxu0 %v199
      %343 = vmatpush.msra.mxu0 %v198
      %344 = vmatpush.msra.mxu0 %v197
      %345 = vmatpush.msra.mxu0 %v196
      %346 = vmatpush.msra.mxu0 %v195
      %347 = vmatpush.msra.mxu0 %v194
      %348 = vmatpush.msra.mxu0 %v193
      %349 = vmatpush.msra.mxu0 %v192
      %350 = vmatpush.msra.mxu0 %v191
      %351 = vmatpush.msra.mxu0 %v190
      %352 = vmatpush.msra.mxu0 %v189
      %353 = vmatpush.msra.mxu0 %v188
      %354 = vmatpush.msra.mxu0 %v187
      %355 = vmatmul.f32.gmra.mxu0 %v303
      %v356 = vpop.f32.mrf.mxu0
      %v357 = vadd.f32 %v328, %v356
      %358 = vmatmul.f32.gmra.mxu0 %v305
      %v359 = vpop.f32.mrf.mxu0
      %v360 = vadd.f32 %v331, %v359
      %361 = vmatmul.f32.gmra.mxu0 %v307
      %v362 = vpop.f32.mrf.mxu0
      %v363 = vadd.f32 %v334, %v362
      %364 = vmatmul.f32.gmra.mxu0 %v309
      %v365 = vpop.f32.mrf.mxu0
      %v366 = vadd.f32 %v337, %v365
      %367 = vdwg.mxu0
      %368 = vst [vmem:[%s170] sm:$0xff] %v357
      %369 = vst [vmem:[%s170 + $0x8] sm:$0xff] %v360
      %370 = vst [vmem:[%s170 + $0x10] sm:$0xff] %v363
      %371 = vst [vmem:[%s170 + $0x18] sm:$0x1] %v366
      %p372 = scmp.lt.s32.totalorder %s14, 1
      %s373 = scalar_select %p372, %s14, 1
      %s374 = smul.addr %s373, 4
      %s375 = smul.addr %s374, 8
      %s376 = scalar_lea.vmem %s3, %s375
      // Predicated region
      $region33: #{embedding_forward.1} parent=31 // pred_check
        %p377 = pneg %p100
      $region34: #{embedding_forward.1} parent=31 // pred_check_branch
        %379 = sbr.rel (%p377) target = $region36
      $region35: #{embedding_forward.1} parent=31 // pred_region
        _
      $region36: #{embedding_forward.1} parent=31 // pred_fallthru
        _
    $region32: #{embedding_forward.1} parent=5 // pred_fallthru
      _
    %p380 = scmp.le.s32.totalorder 2, %s9
    // Predicated region
    $region37: #{embedding_forward.1} parent=5 // pred_check
      %p381 = pneg %p380
    $region38: #{embedding_forward.1} parent=5 // pred_check_branch
      %383 = sbr.rel (%p381) target = $region40
    $region39: #{embedding_forward.1} parent=5 // pred_region
      %s384 = ssub.s32 %s9, 2
      // Predicated region
      $region41: #{embedding_forward.1} parent=39 // pred_check
        %p385 = pneg %p106
      $region42: #{embedding_forward.1} parent=39 // pred_check_branch
        %387 = sbr.rel (%p385) target = $region44
      $region43: #{embedding_forward.1} parent=39 // pred_region
        %p388 = scmp.lt.s32.totalorder %s15, 1
        %s389 = scalar_select %p388, %s15, 1
        %s390 = smul.addr %s389, 4
        %s391 = smul.addr %s390, 8
        %s392 = scalar_lea.vmem %s3, %s391
      $region44: #{embedding_forward.1} parent=39 // pred_fallthru
        _
    $region40: #{embedding_forward.1} parent=5 // pred_fallthru
      _
  $region6: #{embedding_forward.1} parent=0 // loop_footer
    %s13 = sadd.s32 1, %s9
  $region7: #{embedding_forward.1} parent=0 // loop_footer_branch
    %8 = sbr.rel target = $region3
  $region8: #{embedding_forward.1} parent=0 // loop_exit
    _

</llo_original>
